<compile_context>
chip_gen: v7x
topology: tpu7x:2x2x1
jax: 0.10.0
libtpu: 0.0.40
codegen_flags: <defaults>
</compile_context>

<pallas_src>
import functools

import jax
import jax.numpy as jnp
from jax.experimental import pallas as pl
from jax.experimental.pallas import tpu as pltpu


# ---------------------------------------------------------------------------
# Kernel 1: per-image partial channel stats of y0 = W @ x (no bias).
#           Output blocks are tiny (C_out, 1); accumulation happens across the
#           spatial-tile ("arbitrary") axis, the batch axis is "parallel"
#           (per-image partials -> race-free, megacore/2-TC friendly).
# ---------------------------------------------------------------------------
def _stats_kernel(x_ref, w_ref, sum_ref, sq_ref, acc_sum, acc_sq):
    t = pl.program_id(1)

    @pl.when(t == 0)
    def _():
        acc_sum[...] = jnp.zeros_like(acc_sum)
        acc_sq[...] = jnp.zeros_like(acc_sq)

    # Lane-dense matmul: (C_out, C_in) @ (C_in, tile_hw) -> (C_out, tile_hw)
    y0 = jnp.dot(w_ref[...], x_ref[...], preferred_element_type=jnp.float32)
    acc_sum[...] += jnp.sum(y0, axis=-1, keepdims=True)        # (C_out, 1)
    acc_sq[...] += jnp.sum(y0 * y0, axis=-1, keepdims=True)    # (C_out, 1)

    @pl.when(t == pl.num_programs(1) - 1)
    def _():
        sum_ref[...] = acc_sum[...]
        sq_ref[...] = acc_sq[...]


# ---------------------------------------------------------------------------
# Kernel 2: recompute y0 = W @ x (cheap, K = C_in), then BatchNorm (batch
#           stats, biased variance) + LeakyReLU, written lane-dense in NCHW.
# ---------------------------------------------------------------------------
def _bn_act_kernel(x_ref, w_ref, sum_ref, sq_ref, gamma_ref, beta_ref, o_ref,
                   *, count, eps, negative_slope):
    inv_count = 1.0 / float(count)
    mean = sum_ref[...] * inv_count                          # (C_out, 1)
    var = jnp.maximum(sq_ref[...] * inv_count - mean * mean, 0.0)
    inv_std = jax.lax.rsqrt(var + eps)
    scale = gamma_ref[...] * inv_std                         # (C_out, 1)
    shift = beta_ref[...] - mean * scale                     # (C_out, 1)

    y0 = jnp.dot(w_ref[...], x_ref[...], preferred_element_type=jnp.float32)
    z = y0 * scale + shift                                   # broadcast over lanes
    o_ref[...] = jnp.where(z >= 0, z, negative_slope * z)


# ---------------------------------------------------------------------------
# Wrapper
# ---------------------------------------------------------------------------
def _pick_tile_hw(hw, max_tile):
    """Largest spatial tile <= max_tile that divides hw (multiple of 128 when
    tiling, or the full extent)."""
    if hw <= max_tile:
        return hw
    for t in range(max_tile - max_tile % 128, 127, -128):
        if hw % t == 0:
            return t
    return hw   # fallback: single block over the whole spatial extent


def conv_block_legacy(x_nchw, weight, bias, gamma, beta,
                      *, eps=1e-5, negative_slope=0.01, max_tile_hw=2048):
    """Forward pass of ConvBlockLegacy (default config) on TPU via Pallas.

    x_nchw : (N, C_in, H, W) float32
    weight : (C_out, C_in, 1, 1) float32   (Conv2d weight)
    bias   : (C_out,) float32              (Conv2d bias; cancels inside BN)
    gamma  : (C_out,) float32              (BatchNorm2d weight)
    beta   : (C_out,) float32              (BatchNorm2d bias)
    returns: (N, C_out, H, W) float32
    """
    N, C_in, H, W = x_nchw.shape
    C_out = weight.shape[0]
    HW = H * W
    tile_hw = _pick_tile_hw(HW, max_tile_hw)
    # TODO(synk): no remainder handling; tile_hw must divide H*W.
    assert HW % tile_hw == 0
    num_t = HW // tile_hw

    # Free reshapes only — no transposes, data stays NCHW end-to-end.
    x3 = x_nchw.reshape(N, C_in, HW)            # (N, C_in, HW)
    w2 = weight.reshape(C_out, C_in)            # (C_out, C_in)
    g_col = gamma.reshape(C_out, 1)
    b_col = beta.reshape(C_out, 1)
    del bias  # exactly cancelled by training-mode BatchNorm (mean subtraction)

    flops = 2 * N * HW * C_in * C_out

    # --- Pass 1: per-image partial channel sum / sumsq of W @ x --------------
    part_sum, part_sq = pl.pallas_call(
        _stats_kernel,
        out_shape=(
            jax.ShapeDtypeStruct((N, C_out, 1), jnp.float32),
            jax.ShapeDtypeStruct((N, C_out, 1), jnp.float32),
        ),
        grid_spec=pltpu.PrefetchScalarGridSpec(
            num_scalar_prefetch=0,
            grid=(N, num_t),
            in_specs=[
                pl.BlockSpec((None, C_in, tile_hw), lambda n, t: (n, 0, t)),
                pl.BlockSpec((C_out, C_in), lambda n, t: (0, 0)),
            ],
            out_specs=[
                pl.BlockSpec((None, C_out, 1), lambda n, t: (n, 0, 0)),
                pl.BlockSpec((None, C_out, 1), lambda n, t: (n, 0, 0)),
            ],
            scratch_shapes=[
                pltpu.VMEM((C_out, 1), jnp.float32),
                pltpu.VMEM((C_out, 1), jnp.float32),
            ],
        ),
        compiler_params=pltpu.CompilerParams(
            dimension_semantics=("parallel", "arbitrary")),
        cost_estimate=pl.CostEstimate(
            flops=flops, transcendentals=0,
            bytes_accessed=4 * (N * HW * C_in + C_out * C_in + 2 * N * C_out)),
    )(x3, w2)

    # Tiny cross-image reduction of the partials (N, C_out, 1) -> (C_out, 1).
    ch_sum = jnp.sum(part_sum, axis=0)
    ch_sq = jnp.sum(part_sq, axis=0)

    # --- Pass 2: recompute conv + BatchNorm(batch stats) + LeakyReLU ---------
    kernel2 = functools.partial(
        _bn_act_kernel, count=N * HW, eps=eps, negative_slope=negative_slope)
    out3 = pl.pallas_call(
        kernel2,
        out_shape=jax.ShapeDtypeStruct((N, C_out, HW), jnp.float32),
        grid_spec=pltpu.PrefetchScalarGridSpec(
            num_scalar_prefetch=0,
            grid=(N, num_t),
            in_specs=[
                pl.BlockSpec((None, C_in, tile_hw), lambda n, t: (n, 0, t)),
                pl.BlockSpec((C_out, C_in), lambda n, t: (0, 0)),
                pl.BlockSpec((C_out, 1), lambda n, t: (0, 0)),
                pl.BlockSpec((C_out, 1), lambda n, t: (0, 0)),
                pl.BlockSpec((C_out, 1), lambda n, t: (0, 0)),
                pl.BlockSpec((C_out, 1), lambda n, t: (0, 0)),
            ],
            out_specs=pl.BlockSpec((None, C_out, tile_hw),
                                   lambda n, t: (n, 0, t)),
        ),
        compiler_params=pltpu.CompilerParams(
            dimension_semantics=("parallel", "parallel")),
        cost_estimate=pl.CostEstimate(
            flops=flops, transcendentals=0,
            bytes_accessed=4 * (N * HW * (C_in + C_out)
                                + C_out * (C_in + 4))),
    )(x3, w2, ch_sum, ch_sq, g_col, b_col)

    # Free reshape back to NCHW 4-D.
    return out3.reshape(N, C_out, H, W)


# ---------------------------------------------------------------------------
# Pure-JAX reference (same semantics as the PyTorch module in training mode)
# ---------------------------------------------------------------------------
def _reference(x, weight, bias, gamma, beta, eps=1e-5, negative_slope=0.01):
    w = weight.reshape(weight.shape[0], weight.shape[1])       # (C_out, C_in)
    y = jnp.einsum("nchw,oc->nohw", x, w) + bias[None, :, None, None]
    mean = jnp.mean(y, axis=(0, 2, 3), keepdims=True)
    var = jnp.mean((y - mean) ** 2, axis=(0, 2, 3), keepdims=True)  # biased
    z = (y - mean) / jnp.sqrt(var + eps)
    z = z * gamma[None, :, None, None] + beta[None, :, None, None]
    return jnp.where(z >= 0, z, negative_slope * z)


if __name__ == "__main__":
    key = jax.random.PRNGKey(0)
    k_x, k_w, k_b = jax.random.split(key, 3)

    N, C_in, C_out, Hs, Ws = 2, 4, 8, 16, 16

    x = jax.random.normal(k_x, (N, C_in, Hs, Ws), dtype=jnp.float32)
    # Conv2d weight/bias random; BN gamma=1, beta=0 per nn.BatchNorm2d init.
    weight = jax.random.normal(k_w, (C_out, C_in, 1, 1), dtype=jnp.float32) * 0.1
    bias = jax.random.normal(k_b, (C_out,), dtype=jnp.float32) * 0.1
    gamma = jnp.ones((C_out,), dtype=jnp.float32)
    beta = jnp.zeros((C_out,), dtype=jnp.float32)

    out = conv_block_legacy(x, weight, bias, gamma, beta)
    out = jax.block_until_ready(out)

    ref = _reference(x, weight, bias, gamma, beta)
    assert out.shape == (N, C_out, Hs, Ws)
    assert jnp.allclose(out, ref, atol=1e-4, rtol=1e-4), "mismatch vs reference"

    print("KERNEL_OK")
</pallas_src>

<mosaic_0001>
module attributes {stable_mosaic.version = 11 : i64} {
  func.func @_stats_kernel(%arg0: i32, %arg1: i32, %arg2: memref<1x4x256xf32, #tpu.memory_space<vmem>>, %arg3: memref<8x4xf32, #tpu.memory_space<vmem>>, %arg4: memref<1x8x1xf32, #tpu.memory_space<vmem>>, %arg5: memref<1x8x1xf32, #tpu.memory_space<vmem>>, %arg6: memref<8x1xf32, #tpu.memory_space<vmem>>, %arg7: memref<8x1xf32, #tpu.memory_space<vmem>>) attributes {dimension_semantics = [#tpu.dimension_semantics<parallel>, #tpu.dimension_semantics<arbitrary>], iteration_bounds = array<i64: 2, 1>, scalar_prefetch = 0 : i64, scratch_operands = 2 : i64, tpu.core_type = #tpu.core_type<tc>, window_params = [{transform_indices = @transform_0, window_bounds = array<i64: 1, 4, 256>}, {pipeline_mode = #tpu.pipeline_mode<synchronous>, transform_indices = @transform_1, window_bounds = array<i64: 8, 4>}, {transform_indices = @transform_2, window_bounds = array<i64: 1, 8, 1>}, {transform_indices = @transform_3, window_bounds = array<i64: 1, 8, 1>}]} {
    %c0_i32 = arith.constant 0 : i32
    %0 = arith.cmpi eq, %arg1, %c0_i32 : i32
    %1 = arith.extui %0 : i1 to i32
    %c0_i32_0 = arith.constant 0 : i32
    %2 = arith.cmpi ne, %1, %c0_i32_0 : i32
    scf.if %2 {
      %cst_17 = arith.constant 0.000000e+00 : f32
      %21 = vector.broadcast %cst_17 : f32 to vector<8x1xf32>
      %c0_18 = arith.constant 0 : index
      %c0_19 = arith.constant 0 : index
      %22 = vector.load %arg6[%c0_18, %c0_19] : memref<8x1xf32, #tpu.memory_space<vmem>>, vector<8x1xf32>
      tpu.vector_store %arg6[%c0_18, %c0_19], %21 {strides = array<i32>} : memref<8x1xf32, #tpu.memory_space<vmem>>, vector<8x1xf32>,
      %cst_20 = arith.constant 0.000000e+00 : f32
      %23 = vector.broadcast %cst_20 : f32 to vector<8x1xf32>
      %c0_21 = arith.constant 0 : index
      %c0_22 = arith.constant 0 : index
      %24 = vector.load %arg7[%c0_21, %c0_22] : memref<8x1xf32, #tpu.memory_space<vmem>>, vector<8x1xf32>
      tpu.vector_store %arg7[%c0_21, %c0_22], %23 {strides = array<i32>} : memref<8x1xf32, #tpu.memory_space<vmem>>, vector<8x1xf32>,
    } else {
    }
    %c0 = arith.constant 0 : index
    %c0_1 = arith.constant 0 : index
    %3 = vector.load %arg3[%c0, %c0_1] : memref<8x4xf32, #tpu.memory_space<vmem>>, vector<8x4xf32>
    %c0_2 = arith.constant 0 : index
    %c0_3 = arith.constant 0 : index
    %c0_4 = arith.constant 0 : index
    %4 = vector.load %arg2[%c0_2, %c0_3, %c0_4] : memref<1x4x256xf32, #tpu.memory_space<vmem>>, vector<1x4x256xf32>
    %5 = vector.shape_cast %4 : vector<1x4x256xf32> to vector<4x256xf32>
    %cst = arith.constant dense<0.000000e+00> : vector<8x256xf32>
    %6 = tpu.matmul %3, %5, %cst {dimension_numbers = #tpu.dot_dimension_numbers<[1], [0], [0], [1], [0, 0, 1, 1], [], []>} : vector<8x4xf32>, vector<4x256xf32>, vector<8x256xf32> -> vector<8x256xf32>
    %c0_5 = arith.constant 0 : index
    %c0_6 = arith.constant 0 : index
    %7 = vector.load %arg6[%c0_5, %c0_6] : memref<8x1xf32, #tpu.memory_space<vmem>>, vector<8x1xf32>
    %cst_7 = arith.constant dense<0.000000e+00> : vector<8xf32>
    %8 = vector.multi_reduction <add>, %6, %cst_7 [1] : vector<8x256xf32> to vector<8xf32>
    %9 = vector.shape_cast %8 : vector<8xf32> to vector<8x1xf32>
    %10 = arith.addf %7, %9 : vector<8x1xf32>
    %c0_8 = arith.constant 0 : index
    %c0_9 = arith.constant 0 : index
    %11 = vector.load %arg6[%c0_8, %c0_9] : memref<8x1xf32, #tpu.memory_space<vmem>>, vector<8x1xf32>
    tpu.vector_store %arg6[%c0_8, %c0_9], %10 {strides = array<i32>} : memref<8x1xf32, #tpu.memory_space<vmem>>, vector<8x1xf32>,
    %c0_10 = arith.constant 0 : index
    %c0_11 = arith.constant 0 : index
    %12 = vector.load %arg7[%c0_10, %c0_11] : memref<8x1xf32, #tpu.memory_space<vmem>>, vector<8x1xf32>
    %13 = arith.mulf %6, %6 : vector<8x256xf32>
    %cst_12 = arith.constant dense<0.000000e+00> : vector<8xf32>
    %14 = vector.multi_reduction <add>, %13, %cst_12 [1] : vector<8x256xf32> to vector<8xf32>
    %15 = vector.shape_cast %14 : vector<8xf32> to vector<8x1xf32>
    %16 = arith.addf %12, %15 : vector<8x1xf32>
    %c0_13 = arith.constant 0 : index
    %c0_14 = arith.constant 0 : index
    %17 = vector.load %arg7[%c0_13, %c0_14] : memref<8x1xf32, #tpu.memory_space<vmem>>, vector<8x1xf32>
    tpu.vector_store %arg7[%c0_13, %c0_14], %16 {strides = array<i32>} : memref<8x1xf32, #tpu.memory_space<vmem>>, vector<8x1xf32>,
    %c0_i32_15 = arith.constant 0 : i32
    %18 = arith.cmpi eq, %arg1, %c0_i32_15 : i32
    %19 = arith.extui %18 : i1 to i32
    %c0_i32_16 = arith.constant 0 : i32
    %20 = arith.cmpi ne, %19, %c0_i32_16 : i32
    scf.if %20 {
      %c0_17 = arith.constant 0 : index
      %c0_18 = arith.constant 0 : index
      %21 = vector.load %arg6[%c0_17, %c0_18] : memref<8x1xf32, #tpu.memory_space<vmem>>, vector<8x1xf32>
      %c0_19 = arith.constant 0 : index
      %c0_20 = arith.constant 0 : index
      %c0_21 = arith.constant 0 : index
      %22 = vector.load %arg4[%c0_19, %c0_20, %c0_21] : memref<1x8x1xf32, #tpu.memory_space<vmem>>, vector<1x8x1xf32>
      %23 = vector.shape_cast %22 : vector<1x8x1xf32> to vector<8x1xf32>
      %24 = vector.shape_cast %21 : vector<8x1xf32> to vector<1x8x1xf32>
      tpu.vector_store %arg4[%c0_19, %c0_20, %c0_21], %24 {strides = array<i32>} : memref<1x8x1xf32, #tpu.memory_space<vmem>>, vector<1x8x1xf32>,
      %c0_22 = arith.constant 0 : index
      %c0_23 = arith.constant 0 : index
      %25 = vector.load %arg7[%c0_22, %c0_23] : memref<8x1xf32, #tpu.memory_space<vmem>>, vector<8x1xf32>
      %c0_24 = arith.constant 0 : index
      %c0_25 = arith.constant 0 : index
      %c0_26 = arith.constant 0 : index
      %26 = vector.load %arg5[%c0_24, %c0_25, %c0_26] : memref<1x8x1xf32, #tpu.memory_space<vmem>>, vector<1x8x1xf32>
      %27 = vector.shape_cast %26 : vector<1x8x1xf32> to vector<8x1xf32>
      %28 = vector.shape_cast %25 : vector<8x1xf32> to vector<1x8x1xf32>
      tpu.vector_store %arg5[%c0_24, %c0_25, %c0_26], %28 {strides = array<i32>} : memref<1x8x1xf32, #tpu.memory_space<vmem>>, vector<1x8x1xf32>,
    } else {
    }
    return
  }
  func.func @transform_0(%arg0: i32, %arg1: i32) -> (i32, i32, i32) {
    %c0_i32 = arith.constant 0 : i32
    %c0_i32_0 = arith.constant 0 : i32
    return %arg0, %c0_i32, %arg1 : i32, i32, i32
  }
  func.func @transform_1(%arg0: i32, %arg1: i32) -> (i32, i32) {
    %c0_i32 = arith.constant 0 : i32
    %c0_i32_0 = arith.constant 0 : i32
    %c0_i32_1 = arith.constant 0 : i32
    return %c0_i32, %c0_i32_0 : i32, i32
  }
  func.func @transform_2(%arg0: i32, %arg1: i32) -> (i32, i32, i32) {
    %c0_i32 = arith.constant 0 : i32
    %c0_i32_0 = arith.constant 0 : i32
    %c0_i32_1 = arith.constant 0 : i32
    return %arg0, %c0_i32, %c0_i32_0 : i32, i32, i32
  }
  func.func @transform_3(%arg0: i32, %arg1: i32) -> (i32, i32, i32) {
    %c0_i32 = arith.constant 0 : i32
    %c0_i32_0 = arith.constant 0 : i32
    %c0_i32_1 = arith.constant 0 : i32
    return %arg0, %c0_i32, %c0_i32_0 : i32, i32, i32
  }
}

</mosaic_0001>

<llo_original>
// kernel: tpu_custom_call.1
$region0: #{tpu_custom_call.1}
  #allocation0 [shape = 'u32[]', space=smem, size = 0x4, offset = 0x4, fixed_abs, tag = 'smem constant byte address 0x4 - core index']
  #allocation1 [shape = 'u32[144,128]{1,0:T(1,128)}', space=vmem, size = 0x12000, scoped, tag = 'internal scratch']
  #allocation2 [shape = 'f32[8,1]{1,0:T(8,128)}', space=vmem, size = 0x1000, scoped, tag = 'scratch operand']
  #allocation3 [shape = 'f32[8,1]{1,0:T(8,128)}', space=vmem, size = 0x1000, scoped, tag = 'scratch operand']
  %s0 = inlined_call_operand.hbm [shape: f32[2,4,256], index: 0, kind: input, shape index: {}]
  %s1 = inlined_call_operand.vmem [shape: f32[8,4], index: 1, kind: input, shape index: {}]
  %s2 = inlined_call_operand.vmem [shape: f32[2,8,1], index: 2, kind: output, shape index: {0}]
  %s3 = inlined_call_operand.vmem [shape: f32[2,8,1], index: 3, kind: output, shape index: {1}]
  %4 = xla_tuple %s2, %s3
  %s5 = sld [smem:[#allocation0]]
  $region61: #{tpu_custom_call.1} parent=0
    _
  %s7 = ssub.s32 1, %s5
  %s8 = scalar_select 0, %s7, %s5
  $region1: #{tpu_custom_call.1} parent=0
    #allocation4 [shape = 'u8[8192]{0}', space=vmem, size = 0x2000, scoped, tag = 'input window, operand 0']
    #allocation5 [shape = 's32[2]{0}', space=sflag, size = 0x8, scoped, tag = 'scoped memory for tpu_custom_call.1']
    %9 = vsyncpa [#allocation5], 0
    %s10 = scalar_lea.sflag [#allocation5], 1
    %11 = vsyncpa %s10, 0
    loop: start=0, step=1, limit=4
    $region2: #{tpu_custom_call.1} parent=1 // loop_pre_header
      _
    $region3: #{tpu_custom_call.1} parent=1 // loop_header
      %s13 = sphi 0, %s17
      %p14 = scmp.ge.s32.totalorder %s13, 4
      %s20 = sphi 0, %s32
      %s21 = sphi 0, %s28
      %s22 = sphi 0, %s20
      %s23 = sphi 0, %s21
      %s24 = sphi 0, %s22
      %s25 = sphi 0, %s23
      %s37 = sphi 0, %s39
      %s40 = sphi 0, %s37
      %s41 = sphi 0, %s40
      %s57 = sphi 0, %s41
      %s61 = sphi 0, %s61
      %s63 = sphi 0, %s61
      %s64 = sphi 0, %s63
      %s78 = sphi 0, %s64
      %s84 = sphi 0, %s86
      %s87 = sphi 0, %s84
      %s88 = sphi 0, %s87
      %s104 = sphi 0, %s88
      %s110 = sphi 0, %s112
      %s113 = sphi 0, %s110
      %s114 = sphi 0, %s113
      %s130 = sphi 0, %s114
    $region4: #{tpu_custom_call.1} parent=1 // loop_header_branch
      %16 = sbr.rel (%p14) target = $region8
    $region5: #{tpu_custom_call.1} parent=1 // loop_body
      %s18 = ssub.s32 %s13, 1
      %s19 = ssub.s32 %s13, 2
      %s26 = sadd.s32 1, %s21
      %p27 = scmp.ge.s32.totalorder %s26, 1
      %s28 = scalar_select %p27, 0, %s26
      %s29 = sadd.s32 1, %s20
      %s30 = scalar_select %p27, %s29, %s20
      %p31 = scmp.ge.s32.totalorder %s30, 2
      %s32 = scalar_select %p31, 0, %s30
      %s33 = ssub.s32 %s20, %s32
      %s34 = ssub.s32 %s21, %s28
      %s35 = sor.u32 %s33, %s34
      %p36 = scmp.eq.s32.totalorder %s35, 0
      %s38 = sadd.s32 %s37, 1
      %s39 = scalar_select %p36, %s37, %s38
      %p42 = pneg %p36
      %p43 = scmp.eq.s32.totalorder %s13, 1
      %p44 = por %p42, %p43
      %p45 = scmp.ne.s32.totalorder %s37, %s40
      %p46 = scmp.eq.s32.totalorder %s13, 0
      %p47 = por %p45, %p46
      %p48 = scmp.ne.s32.totalorder %s37, %s40
      %p49 = scmp.eq.s32.totalorder %s18, 1
      %p50 = por %p48, %p49
      %p51 = scmp.ne.s32.totalorder %s40, %s41
      %p52 = scmp.eq.s32.totalorder %s18, 0
      %p53 = por %p51, %p52
      %p54 = scmp.ne.s32.totalorder %s40, %s41
      %p55 = scmp.eq.s32.totalorder %s19, 1
      %p56 = por %p54, %p55
      %p58 = scmp.ne.s32.totalorder %s41, %s57
      %p59 = scmp.eq.s32.totalorder %s19, 0
      %p60 = por %p58, %p59
      %s62 = sadd.s32 %s61, 1
      %p65 = scmp.eq.s32.totalorder %s13, 1
      %p66 = scmp.ne.s32.totalorder %s61, %s63
      %p67 = scmp.eq.s32.totalorder %s13, 0
      %p68 = por %p66, %p67
      %p69 = scmp.ne.s32.totalorder %s61, %s63
      %p70 = scmp.eq.s32.totalorder %s18, 1
      %p71 = por %p69, %p70
      %p72 = scmp.ne.s32.totalorder %s63, %s64
      %p73 = scmp.eq.s32.totalorder %s18, 0
      %p74 = por %p72, %p73
      %p75 = scmp.ne.s32.totalorder %s63, %s64
      %p76 = scmp.eq.s32.totalorder %s19, 1
      %p77 = por %p75, %p76
      %p79 = scmp.ne.s32.totalorder %s64, %s78
      %p80 = scmp.eq.s32.totalorder %s19, 0
      %p81 = por %p79, %p80
      %s82 = ssub.s32 %s20, %s32
      %p83 = scmp.eq.s32.totalorder %s82, 0
      %s85 = sadd.s32 %s84, 1
      %s86 = scalar_select %p83, %s84, %s85
      %p89 = pneg %p83
      %p90 = scmp.eq.s32.totalorder %s13, 1
      %p91 = por %p89, %p90
      %p92 = scmp.ne.s32.totalorder %s84, %s87
      %p93 = scmp.eq.s32.totalorder %s13, 0
      %p94 = por %p92, %p93
      %p95 = scmp.ne.s32.totalorder %s84, %s87
      %p96 = scmp.eq.s32.totalorder %s18, 1
      %p97 = por %p95, %p96
      %p98 = scmp.ne.s32.totalorder %s87, %s88
      %p99 = scmp.eq.s32.totalorder %s18, 0
      %p100 = por %p98, %p99
      %p101 = scmp.ne.s32.totalorder %s87, %s88
      %p102 = scmp.eq.s32.totalorder %s19, 1
      %p103 = por %p101, %p102
      %p105 = scmp.ne.s32.totalorder %s88, %s104
      %p106 = scmp.eq.s32.totalorder %s19, 0
      %p107 = por %p105, %p106
      %s108 = ssub.s32 %s20, %s32
      %p109 = scmp.eq.s32.totalorder %s108, 0
      %s111 = sadd.s32 %s110, 1
      %s112 = scalar_select %p109, %s110, %s111
      %p115 = pneg %p109
      %p116 = scmp.eq.s32.totalorder %s13, 1
      %p117 = por %p115, %p116
      %p118 = scmp.ne.s32.totalorder %s110, %s113
      %p119 = scmp.eq.s32.totalorder %s13, 0
      %p120 = por %p118, %p119
      %p121 = scmp.ne.s32.totalorder %s110, %s113
      %p122 = scmp.eq.s32.totalorder %s18, 1
      %p123 = por %p121, %p122
      %p124 = scmp.ne.s32.totalorder %s113, %s114
      %p125 = scmp.eq.s32.totalorder %s18, 0
      %p126 = por %p124, %p125
      %p127 = scmp.ne.s32.totalorder %s113, %s114
      %p128 = scmp.eq.s32.totalorder %s19, 1
      %p129 = por %p127, %p128
      %p131 = scmp.ne.s32.totalorder %s114, %s130
      %p132 = scmp.eq.s32.totalorder %s19, 0
      %p133 = por %p131, %p132
      %p134 = scmp.le.s32.totalorder 1, %s13
      %p135 = scmp.lt.s32.totalorder %s13, 3
      %p136 = pnand %p134, %p135
      %p137 = pneg %p136
      // Predicated region
      $region9: #{tpu_custom_call.1} parent=5 // pred_check
        _
      $region10: #{tpu_custom_call.1} parent=5 // pred_check_branch
        %139 = sbr.rel (%p136) target = $region12
      $region11: #{tpu_custom_call.1} parent=5 // pred_region
        %s140 = ssub.s32 %s13, 1
        // Predicated region
        $region13: #{tpu_custom_call.1} parent=11 // pred_check
          %p141 = pneg %p74
        $region14: #{tpu_custom_call.1} parent=11 // pred_check_branch
          %143 = sbr.rel (%p141) target = $region16
        $region15: #{tpu_custom_call.1} parent=11 // pred_region
          _
        $region16: #{tpu_custom_call.1} parent=11 // pred_fallthru
          _
      $region12: #{tpu_custom_call.1} parent=5 // pred_fallthru
        _
      %p144 = scmp.lt.s32.totalorder %s13, 2
      // Predicated region
      $region17: #{tpu_custom_call.1} parent=5 // pred_check
        %p145 = pneg %p144
      $region18: #{tpu_custom_call.1} parent=5 // pred_check_branch
        %147 = sbr.rel (%p145) target = $region20
      $region19: #{tpu_custom_call.1} parent=5 // pred_region
        // Predicated region
        $region21: #{tpu_custom_call.1} parent=19 // pred_check
          %p148 = pneg %p47
        $region22: #{tpu_custom_call.1} parent=19 // pred_check_branch
          %150 = sbr.rel (%p148) target = $region24
        $region23: #{tpu_custom_call.1} parent=19 // pred_region
          %s151 = sand.u32 %s37, 1
          %s152 = scalar_lea.sflag [#allocation5], %s151
          %s153 = sand.u32 %s37, 1
          %s154 = smul.addr %s153, 8
          %s155 = scalar_lea.vmem [#allocation4], %s154
          %s156 = smul.u32 2, %s21
          %s158 = ssub.s32 128, 128
          %159 = vsyncadd %s152, %s158
          %s160 = smul.addr %s20, 2
          %s161 = sadd.s32 %s156, %s160
          %s162 = smul.addr %s161, 64
          %s163 = scalar_lea.hbm %s0, %s162
          %s165 = sshll.u32 %s155, 4
          %s166 = int_to_ptr.vmem [resolvable:$true] %s165
          %168 = dma.hbm_to_vmem [thread:$0]  %s163, 128, %s166, %s152
        $region24: #{tpu_custom_call.1} parent=19 // pred_fallthru
          _
      $region20: #{tpu_custom_call.1} parent=5 // pred_fallthru
        _
      %p169 = scmp.le.s32.totalorder 1, %s13
      %p170 = scmp.lt.s32.totalorder %s13, 3
      %p171 = pnand %p169, %p170
      %p172 = pneg %p171
      // Predicated region
      $region25: #{tpu_custom_call.1} parent=5 // pred_check
        _
      $region26: #{tpu_custom_call.1} parent=5 // pred_check_branch
        %174 = sbr.rel (%p171) target = $region28
      $region27: #{tpu_custom_call.1} parent=5 // pred_region
        %s175 = ssub.s32 %s13, 1
        %s176 = sand.u32 %s40, 1
        %s177 = scalar_lea.sflag [#allocation5], %s176
        %s178 = sand.u32 %s40, 1
        %s179 = smul.addr %s178, 8
        %s180 = scalar_lea.vmem [#allocation4], %s179
        // Predicated region
        $region29: #{tpu_custom_call.1} parent=27 // pred_check
          %p181 = pneg %p53
        $region30: #{tpu_custom_call.1} parent=27 // pred_check_branch
          %183 = sbr.rel (%p181) target = $region32
        $region31: #{tpu_custom_call.1} parent=27 // pred_region
          %184 = dma.done %s177, 128
        $region32: #{tpu_custom_call.1} parent=27 // pred_fallthru
          _
        %s185 = sand.u32 %s40, 1
        %s186 = scalar_lea.sflag [#allocation5], %s185
        %s187 = sand.u32 %s40, 1
        %s188 = smul.addr %s187, 8
        %s189 = scalar_lea.vmem [#allocation4], %s188
        %p190 = pneg %p53
        %p191 = pneg %p50
        %p192 = pneg %p74
        %p193 = pneg %p71
        %p194 = pneg %p100
        %p195 = pneg %p97
        %p196 = scmp.lt.s32.totalorder %s22, 1
        %s197 = scalar_select %p196, %s22, 1
        %s198 = smul.addr %s197, 8
        %s199 = scalar_lea.vmem %s2, %s198
        %p200 = pneg %p126
        %p201 = pneg %p123
        %p202 = scmp.lt.s32.totalorder %s22, 1
        %s203 = scalar_select %p202, %s22, 1
        %s204 = smul.addr %s203, 8
        %s205 = scalar_lea.vmem %s3, %s204
        %s206 = smul.u32 2, %s23
        %p207 = scmp.lt.s32.totalorder %s22, 1
        %s208 = scalar_select %p207, %s22, 1
        %s209 = smul.addr %s208, 8
        %s210 = scalar_lea.vmem %s2, %s209
        %p211 = scmp.lt.s32.totalorder %s22, 1
        %s212 = scalar_select %p211, %s22, 1
        %s213 = smul.addr %s212, 8
        %s214 = scalar_lea.vmem %s3, %s213
        %p215 = scmp.eq.s32.totalorder %s23, 0
        // Predicated region
        $region33: #{tpu_custom_call.1} parent=27 // pred_check
          %p216 = pneg %p215
        $region34: #{tpu_custom_call.1} parent=27 // pred_check_branch
          %218 = sbr.rel (%p216) target = $region36
        $region35: #{tpu_custom_call.1} parent=27 // pred_region
          %vm219 = vcmask 7168
          %220 = vst.msk [vmem:[#allocation2] sm:$0xff] %vm219, 0.0
          %221 = vst.msk [vmem:[#allocation3] sm:$0xff] %vm219, 0.0
        $region36: #{tpu_custom_call.1} parent=27 // pred_fallthru
          _
        %v222 = vld [vmem:[%s1] sm:$0xff]
        %v223 = vld [vmem:[%s180] sm:$0xff]
        %v225 = vcombine.high %v223, %v223
        %vm226 = vcmask 31744
        %v228 = vsel %vm226, %v222, 0
        %vm230 = vcmask 1043456
        %v231 = vsel %vm230, %v223, 0
        %v233 = vsel %vm230, %v225, 0
        %235 = vmatprep.subr.mxu0 %v233
        %236 = vmatpush1.msra.mxu0 %v231
        %237 = vmatprep.subr.mxu0 0.0
        %238 = vmatpush1.msra.mxu0 0.0
        %239 = vmatprep.subr.mxu0 0.0
        %240 = vmatpush1.msra.mxu0 0.0
        %241 = vmatprep.subr.mxu0 0.0
        %242 = vmatpush1.msra.mxu0 0.0
        %243 = vmatprep.subr.mxu0 0.0
        %244 = vmatpush1.msra.mxu0 0.0
        %245 = vmatprep.subr.mxu0 0.0
        %246 = vmatpush1.msra.mxu0 0.0
        %247 = vmatprep.subr.mxu0 0.0
        %248 = vmatpush1.msra.mxu0 0.0
        %249 = vmatprep.subr.mxu0 0.0
        %250 = vmatpush1.msra.mxu0 0.0
        %251 = vmatprep.subr.mxu0 0.0
        %252 = vmatpush1.msra.mxu0 0.0
        %253 = vmatprep.subr.mxu0 0.0
        %254 = vmatpush1.msra.mxu0 0.0
        %255 = vmatprep.subr.mxu0 0.0
        %256 = vmatpush1.msra.mxu0 0.0
        %257 = vmatprep.subr.mxu0 0.0
        %258 = vmatpush1.msra.mxu0 0.0
        %259 = vmatprep.subr.mxu0 0.0
        %260 = vmatpush1.msra.mxu0 0.0
        %261 = vmatprep.subr.mxu0 0.0
        %262 = vmatpush1.msra.mxu0 0.0
        %263 = vmatprep.subr.mxu0 0.0
        %264 = vmatpush1.msra.mxu0 0.0
        %265 = vmatprep.subr.mxu0 0.0
        %266 = vmatpush1.msra.mxu0 0.0
        %267 = vmatprep.subr.mxu0 0.0
        %268 = vmatpush1.msra.mxu0 0.0
        %269 = vmatprep.subr.mxu0 0.0
        %270 = vmatpush1.msra.mxu0 0.0
        %271 = vmatprep.subr.mxu0 0.0
        %272 = vmatpush1.msra.mxu0 0.0
        %273 = vmatprep.subr.mxu0 0.0
        %274 = vmatpush1.msra.mxu0 0.0
        %275 = vmatprep.subr.mxu0 0.0
        %276 = vmatpush1.msra.mxu0 0.0
        %277 = vmatprep.subr.mxu0 0.0
        %278 = vmatpush1.msra.mxu0 0.0
        %279 = vmatprep.subr.mxu0 0.0
        %280 = vmatpush1.msra.mxu0 0.0
        %281 = vmatprep.subr.mxu0 0.0
        %282 = vmatpush1.msra.mxu0 0.0
        %283 = vmatprep.subr.mxu0 0.0
        %284 = vmatpush1.msra.mxu0 0.0
        %285 = vmatprep.subr.mxu0 0.0
        %286 = vmatpush1.msra.mxu0 0.0
        %287 = vmatprep.subr.mxu0 0.0
        %288 = vmatpush1.msra.mxu0 0.0
        %289 = vmatprep.subr.mxu0 0.0
        %290 = vmatpush1.msra.mxu0 0.0
        %291 = vmatprep.subr.mxu0 0.0
        %292 = vmatpush1.msra.mxu0 0.0
        %293 = vmatprep.subr.mxu0 0.0
        %294 = vmatpush1.msra.mxu0 0.0
        %295 = vmatprep.subr.mxu0 0.0
        %296 = vmatpush1.msra.mxu0 0.0
        %297 = vmatprep.subr.mxu0 0.0
        %298 = vmatpush1.msra.mxu0 0.0
        %299 = vmatprep.mubr.f32.mxu0 0.0
        %300 = vmatmul.mubr.f32.gmra.mrb[0].mxu0 %v228
        %v301 = vpop.f32.mrb[0].mxu0
        %v302 = vadd.f32 0.0, %v301
        %v303 = vpop.f32.mrb[0].mxu0
        %v304 = vadd.f32 0.0, %v303
        %305 = vdwg.mxu0
        %v306 = vld [vmem:[#allocation2] sm:$0xff]
        %v307 = vadd.f32 %v302, %v304
        %308 = vadd.xlane.f32.xlu0 %v307
        %v309 = vpop.xlane.xlu0 %308
        %v310 = vadd.f32 %v306, %v309
        %vm311 = vcmask 7168
        %312 = vst.msk [vmem:[#allocation2] sm:$0xff] %vm311, %v310
        %v313 = vld [vmem:[#allocation3] sm:$0xff]
        %v314 = vmul.f32 %v302, %v302
        %v315 = vmul.f32 %v304, %v304
        %v316 = vadd.f32 %v314, %v315
        %317 = vadd.xlane.f32.xlu0 %v316
        %v318 = vpop.xlane.xlu0 %317
        %v319 = vadd.f32 %v313, %v318
        %320 = vst.msk [vmem:[#allocation3] sm:$0xff] %vm311, %v319
        // Predicated region
        $region37: #{tpu_custom_call.1} parent=27 // pred_check
          %p321 = pneg %p215
        $region38: #{tpu_custom_call.1} parent=27 // pred_check_branch
          %323 = sbr.rel (%p321) target = $region40
        $region39: #{tpu_custom_call.1} parent=27 // pred_region
          %v324 = vld [vmem:[#allocation2] sm:$0xff]
          %325 = vst.msk [vmem:[%s210] sm:$0xff] %vm311, %v324
          %v326 = vld [vmem:[#allocation3] sm:$0xff]
          %327 = vst.msk [vmem:[%s214] sm:$0xff] %vm311, %v326
        $region40: #{tpu_custom_call.1} parent=27 // pred_fallthru
          _
        %p328 = scmp.lt.s32.totalorder %s22, 1
        %s329 = scalar_select %p328, %s22, 1
        %s330 = smul.addr %s329, 8
        %s331 = scalar_lea.vmem %s2, %s330
        %p332 = scmp.lt.s32.totalorder %s22, 1
        %s333 = scalar_select %p332, %s22, 1
        %s334 = smul.addr %s333, 8
        %s335 = scalar_lea.vmem %s3, %s334
        // Predicated region
        $region41: #{tpu_custom_call.1} parent=27 // pred_check
          %p336 = pneg %p97
        $region42: #{tpu_custom_call.1} parent=27 // pred_check_branch
          %338 = sbr.rel (%p336) target = $region44
        $region43: #{tpu_custom_call.1} parent=27 // pred_region
          _
        $region44: #{tpu_custom_call.1} parent=27 // pred_fallthru
          _
        // Predicated region
        $region45: #{tpu_custom_call.1} parent=27 // pred_check
          %p339 = pneg %p123
        $region46: #{tpu_custom_call.1} parent=27 // pred_check_branch
          %341 = sbr.rel (%p339) target = $region48
        $region47: #{tpu_custom_call.1} parent=27 // pred_region
          _
        $region48: #{tpu_custom_call.1} parent=27 // pred_fallthru
          _
      $region28: #{tpu_custom_call.1} parent=5 // pred_fallthru
        _
      %p342 = scmp.le.s32.totalorder 2, %s13
      // Predicated region
      $region49: #{tpu_custom_call.1} parent=5 // pred_check
        %p343 = pneg %p342
      $region50: #{tpu_custom_call.1} parent=5 // pred_check_branch
        %345 = sbr.rel (%p343) target = $region52
      $region51: #{tpu_custom_call.1} parent=5 // pred_region
        %s346 = ssub.s32 %s13, 2
        // Predicated region
        $region53: #{tpu_custom_call.1} parent=51 // pred_check
          %p347 = pneg %p103
        $region54: #{tpu_custom_call.1} parent=51 // pred_check_branch
          %349 = sbr.rel (%p347) target = $region56
        $region55: #{tpu_custom_call.1} parent=51 // pred_region
          %p350 = scmp.lt.s32.totalorder %s24, 1
          %s351 = scalar_select %p350, %s24, 1
          %s352 = smul.addr %s351, 8
          %s353 = scalar_lea.vmem %s2, %s352
        $region56: #{tpu_custom_call.1} parent=51 // pred_fallthru
          _
        // Predicated region
        $region57: #{tpu_custom_call.1} parent=51 // pred_check
          %p354 = pneg %p129
        $region58: #{tpu_custom_call.1} parent=51 // pred_check_branch
          %356 = sbr.rel (%p354) target = $region60
        $region59: #{tpu_custom_call.1} parent=51 // pred_region
          %p357 = scmp.lt.s32.totalorder %s24, 1
          %s358 = scalar_select %p357, %s24, 1
          %s359 = smul.addr %s358, 8
          %s360 = scalar_lea.vmem %s3, %s359
        $region60: #{tpu_custom_call.1} parent=51 // pred_fallthru
          _
      $region52: #{tpu_custom_call.1} parent=5 // pred_fallthru
        _
    $region6: #{tpu_custom_call.1} parent=1 // loop_footer
      %s17 = sadd.s32 1, %s13
    $region7: #{tpu_custom_call.1} parent=1 // loop_footer_branch
      %12 = sbr.rel target = $region3
    $region8: #{tpu_custom_call.1} parent=1 // loop_exit
      _
    %361 = vsyncpa [#allocation5], 1
    %s362 = scalar_lea.sflag [#allocation5], 1
    %363 = vsyncpa %s362, 1

</llo_original>
